<compile_context>
chip_gen: v5e
topology: v5e:2x2
jax: 0.10.0
libtpu: 0.0.40
codegen_flags: <defaults>
</compile_context>

<pallas_src>
import jax
import jax.numpy as jnp
from jax.experimental import pallas as pl
from jax.experimental.pallas import tpu as pltpu


_TARGET_BLOCK_BYTES = 6 * 1024 * 1024   # ~6 MiB/block -> ~24 MiB double-buffered footprint
_MIN_BLOCK_BYTES = 1 * 1024 * 1024      # don't split below ~1 MiB just to add grid steps
_BASE_VMEM_LIMIT = 32 * 1024 * 1024


def _sublane_pack(itemsize: int) -> int:
    # Rows per vreg tile: 8 for 4-byte, 16 for 2-byte, 32 for 1-byte dtypes.
    return max(8, 32 // itemsize)


def _spatial_view(h: int, w: int):
    """View the contiguous H*W slab as (S, L), lane-dense (L % 128 == 0) when possible."""
    hw = h * w
    if hw % 128 != 0:
        # Natural (H, W): last block dim equals the full array dim (always legal);
        # only the lane tail of each row is masked. Sublane axis (H) is still tiled.
        return h, w
    best_l = 128
    for mult in range(1, hw // 128 + 1):
        l = 128 * mult
        if l > 4096:
            break
        if hw % l == 0:
            best_l = l
    return hw // best_l, best_l


def _choose_blocks(n: int, c: int, s: int, l: int, itemsize: int):
    """Pick (Nb, Sb) for a block of shape (Nb, C, Sb, L)."""
    pack = _sublane_pack(itemsize)
    row_bytes = c * l * itemsize  # bytes of one sublane-row of the block (all C channels)

    def aligned(sb: int) -> bool:
        return sb == s or sb % pack == 0

    divisors = [d for d in range(1, s + 1) if s % d == 0]
    fitting = [d for d in divisors if aligned(d) and d * row_bytes <= _TARGET_BLOCK_BYTES]
    if fitting:
        sb = max(fitting)
    else:
        # No aligned divisor fits the byte target: take the smallest legal one so the
        # block shape always lowers.  (Never return an unaligned divisor like 7.)
        aligned_divs = [d for d in divisors if aligned(d)]
        sb = min(aligned_divs) if aligned_divs else s
        # TODO(synk): for huge images whose H has no multiple-of-pack divisor, pad H in
        # the wrapper instead of falling back to the full dim.

    # If a whole per-image slab fits the target, fold several batch images in too.
    nb = 1
    if sb == s:
        n_divs = [d for d in range(1, n + 1) if n % d == 0]
        ok = [d for d in n_divs if d * s * row_bytes <= _TARGET_BLOCK_BYTES]
        if ok:
            nb = max(ok)

    # Keep enough (and even-count) grid steps for v7x megacore sharding, as long as each
    # block stays comfortably above _MIN_BLOCK_BYTES.
    def total_steps(nb_, sb_):
        return (n // nb_) * (s // sb_)

    def block_bytes(nb_, sb_):
        return nb_ * sb_ * row_bytes

    while total_steps(nb, sb) < 8 and block_bytes(nb, sb) >= 2 * _MIN_BLOCK_BYTES:
        if nb % 2 == 0:
            nb //= 2
        elif sb % 2 == 0 and (sb // 2) % pack == 0:
            sb //= 2
        else:
            break

    return nb, sb


def _normalize_kernel(mean_ref, inv_std_ref, x_ref, o_ref):
    # mean_ref / inv_std_ref: SMEM, shape (C,), float32.
    # x_ref / o_ref: VMEM tile, shape (Nb, C, Sb, L).
    # C is tiny (3) and static, so unroll: each channel slab is one full-width
    # vld -> sub -> mul -> vst stream with plain scalar constants.
    num_c = x_ref.shape[1]
    for c in range(num_c):
        xv = x_ref[:, c, :, :].astype(jnp.float32)
        o_ref[:, c, :, :] = ((xv - mean_ref[c]) * inv_std_ref[c]).astype(o_ref.dtype)


def image_normalize(x: jax.Array, mean, std) -> jax.Array:
    """(x - mean[None,:,None,None]) / std[None,:,None,None] for NCHW x."""
    N, C, H, W = x.shape

    # Per-channel constants, kept in float32 regardless of x.dtype.
    mean_f32 = jnp.asarray(mean, jnp.float32).reshape(C)
    inv_std_f32 = (1.0 / jnp.asarray(std, jnp.float32)).reshape(C)

    # Lane-dense spatial view: each (n, c) slab is contiguous, so this reshape is free.
    S, L = _spatial_view(H, W)
    itemsize = jnp.dtype(x.dtype).itemsize
    Nb, Sb = _choose_blocks(N, C, S, L, itemsize)
    x4 = x.reshape(N, C, S, L)

    grid = (N // Nb, S // Sb)
    blk = (Nb, C, Sb, L)
    idx = lambda n, s: (n, 0, s, 0)

    block_bytes = Nb * C * Sb * L * itemsize
    # 4x block (double-buffered in + out) plus slack; 32 MiB is plenty for the 6 MiB
    # target, only grows for the rare oversized-fallback block.
    vmem_limit = max(_BASE_VMEM_LIMIT,
                     min(64 * 1024 * 1024, 4 * block_bytes + 2 * 1024 * 1024))

    out = pl.pallas_call(
        _normalize_kernel,
        out_shape=jax.ShapeDtypeStruct((N, C, S, L), x.dtype),
        grid_spec=pl.GridSpec(
            grid=grid,
            in_specs=[
                pl.BlockSpec(memory_space=pltpu.SMEM),   # mean (C,)
                pl.BlockSpec(memory_space=pltpu.SMEM),   # inv_std (C,)
                pl.BlockSpec(blk, idx),
            ],
            out_specs=pl.BlockSpec(blk, idx),
        ),
        compiler_params=pltpu.CompilerParams(
            dimension_semantics=("parallel", "parallel"),
            vmem_limit_bytes=vmem_limit,
        ),
    )(mean_f32, inv_std_f32, x4)

    return out.reshape(N, C, H, W)


if __name__ == "__main__":
    # Deterministic synthetic inputs (ImageNet-style normalization constants).
    key = jax.random.PRNGKey(0)
    N, C, H, W = 2, 3, 16, 16  # module's __init__ implies 3 channels
    x = jax.random.uniform(key, (N, C, H, W), dtype=jnp.float32)

    mean = (0.485, 0.456, 0.406)
    std = (0.229, 0.224, 0.225)

    out = image_normalize(x, mean, std)
    out = jax.block_until_ready(out)

    # Reference check in plain JAX (true divide, matching PyTorch semantics).
    ref = (x - jnp.asarray(mean, jnp.float32).reshape(1, C, 1, 1)) / \
          jnp.asarray(std, jnp.float32).reshape(1, C, 1, 1)
    assert out.shape == (N, C, H, W)
    # reciprocal-multiply vs divide: allow a couple of ulps of relative slack.
    assert jnp.allclose(out, ref, atol=1e-6, rtol=1e-5)

    print("KERNEL_OK")
</pallas_src>

<mosaic_0001>
module attributes {stable_mosaic.version = 11 : i64} {
  func.func @_normalize_kernel(%arg0: i32, %arg1: i32, %arg2: memref<3xf32, #tpu.memory_space<smem>>, %arg3: memref<3xf32, #tpu.memory_space<smem>>, %arg4: memref<2x3x1x256xf32, #tpu.memory_space<vmem>>, %arg5: memref<2x3x1x256xf32, #tpu.memory_space<vmem>>) attributes {dimension_semantics = [#tpu.dimension_semantics<parallel>, #tpu.dimension_semantics<parallel>], iteration_bounds = array<i64: 1, 1>, scalar_prefetch = 0 : i64, scratch_operands = 0 : i64, tpu.core_type = #tpu.core_type<tc>, window_params = [{transform_indices = @transform_0, window_bounds = array<i64: 3>}, {transform_indices = @transform_1, window_bounds = array<i64: 3>}, {transform_indices = @transform_2, window_bounds = array<i64: 2, 3, 1, 256>}, {transform_indices = @transform_3, window_bounds = array<i64: 2, 3, 1, 256>}]} {
    %c0 = arith.constant 0 : index
    %c0_0 = arith.constant 0 : index
    %c0_1 = arith.constant 0 : index
    %c0_2 = arith.constant 0 : index
    %0 = vector.load %arg4[%c0, %c0_0, %c0_1, %c0_2] : memref<2x3x1x256xf32, #tpu.memory_space<vmem>>, vector<2x1x1x256xf32>
    %1 = vector.shape_cast %0 : vector<2x1x1x256xf32> to vector<2x1x256xf32>
    %c0_3 = arith.constant 0 : index
    %2 = memref.load %arg2[%c0_3] : memref<3xf32, #tpu.memory_space<smem>>
    %3 = vector.broadcast %2 : f32 to vector<2x1x256xf32>
    %4 = arith.subf %1, %3 : vector<2x1x256xf32>
    %c0_4 = arith.constant 0 : index
    %5 = memref.load %arg3[%c0_4] : memref<3xf32, #tpu.memory_space<smem>>
    %6 = vector.broadcast %5 : f32 to vector<2x1x256xf32>
    %7 = arith.mulf %4, %6 : vector<2x1x256xf32>
    %c0_5 = arith.constant 0 : index
    %c0_6 = arith.constant 0 : index
    %c0_7 = arith.constant 0 : index
    %c0_8 = arith.constant 0 : index
    %8 = vector.load %arg5[%c0_5, %c0_6, %c0_7, %c0_8] : memref<2x3x1x256xf32, #tpu.memory_space<vmem>>, vector<2x1x1x256xf32>
    %9 = vector.shape_cast %8 : vector<2x1x1x256xf32> to vector<2x1x256xf32>
    %10 = vector.shape_cast %7 : vector<2x1x256xf32> to vector<2x1x1x256xf32>
    tpu.vector_store %arg5[%c0_5, %c0_6, %c0_7, %c0_8], %10 {strides = array<i32>} : memref<2x3x1x256xf32, #tpu.memory_space<vmem>>, vector<2x1x1x256xf32>,
    %c0_9 = arith.constant 0 : index
    %c1 = arith.constant 1 : index
    %c0_10 = arith.constant 0 : index
    %c0_11 = arith.constant 0 : index
    %11 = vector.load %arg4[%c0_9, %c1, %c0_10, %c0_11] : memref<2x3x1x256xf32, #tpu.memory_space<vmem>>, vector<2x1x1x256xf32>
    %12 = vector.shape_cast %11 : vector<2x1x1x256xf32> to vector<2x1x256xf32>
    %c1_12 = arith.constant 1 : index
    %13 = memref.load %arg2[%c1_12] : memref<3xf32, #tpu.memory_space<smem>>
    %14 = vector.broadcast %13 : f32 to vector<2x1x256xf32>
    %15 = arith.subf %12, %14 : vector<2x1x256xf32>
    %c1_13 = arith.constant 1 : index
    %16 = memref.load %arg3[%c1_13] : memref<3xf32, #tpu.memory_space<smem>>
    %17 = vector.broadcast %16 : f32 to vector<2x1x256xf32>
    %18 = arith.mulf %15, %17 : vector<2x1x256xf32>
    %c0_14 = arith.constant 0 : index
    %c1_15 = arith.constant 1 : index
    %c0_16 = arith.constant 0 : index
    %c0_17 = arith.constant 0 : index
    %19 = vector.load %arg5[%c0_14, %c1_15, %c0_16, %c0_17] : memref<2x3x1x256xf32, #tpu.memory_space<vmem>>, vector<2x1x1x256xf32>
    %20 = vector.shape_cast %19 : vector<2x1x1x256xf32> to vector<2x1x256xf32>
    %21 = vector.shape_cast %18 : vector<2x1x256xf32> to vector<2x1x1x256xf32>
    tpu.vector_store %arg5[%c0_14, %c1_15, %c0_16, %c0_17], %21 {strides = array<i32>} : memref<2x3x1x256xf32, #tpu.memory_space<vmem>>, vector<2x1x1x256xf32>,
    %c0_18 = arith.constant 0 : index
    %c2 = arith.constant 2 : index
    %c0_19 = arith.constant 0 : index
    %c0_20 = arith.constant 0 : index
    %22 = vector.load %arg4[%c0_18, %c2, %c0_19, %c0_20] : memref<2x3x1x256xf32, #tpu.memory_space<vmem>>, vector<2x1x1x256xf32>
    %23 = vector.shape_cast %22 : vector<2x1x1x256xf32> to vector<2x1x256xf32>
    %c2_21 = arith.constant 2 : index
    %24 = memref.load %arg2[%c2_21] : memref<3xf32, #tpu.memory_space<smem>>
    %25 = vector.broadcast %24 : f32 to vector<2x1x256xf32>
    %26 = arith.subf %23, %25 : vector<2x1x256xf32>
    %c2_22 = arith.constant 2 : index
    %27 = memref.load %arg3[%c2_22] : memref<3xf32, #tpu.memory_space<smem>>
    %28 = vector.broadcast %27 : f32 to vector<2x1x256xf32>
    %29 = arith.mulf %26, %28 : vector<2x1x256xf32>
    %c0_23 = arith.constant 0 : index
    %c2_24 = arith.constant 2 : index
    %c0_25 = arith.constant 0 : index
    %c0_26 = arith.constant 0 : index
    %30 = vector.load %arg5[%c0_23, %c2_24, %c0_25, %c0_26] : memref<2x3x1x256xf32, #tpu.memory_space<vmem>>, vector<2x1x1x256xf32>
    %31 = vector.shape_cast %30 : vector<2x1x1x256xf32> to vector<2x1x256xf32>
    %32 = vector.shape_cast %29 : vector<2x1x256xf32> to vector<2x1x1x256xf32>
    tpu.vector_store %arg5[%c0_23, %c2_24, %c0_25, %c0_26], %32 {strides = array<i32>} : memref<2x3x1x256xf32, #tpu.memory_space<vmem>>, vector<2x1x1x256xf32>,
    return
  }
  func.func @transform_0(%arg0: i32, %arg1: i32) -> i32 {
    %c0_i32 = arith.constant 0 : i32
    %c0_i32_0 = arith.constant 0 : i32
    return %c0_i32 : i32
  }
  func.func @transform_1(%arg0: i32, %arg1: i32) -> i32 {
    %c0_i32 = arith.constant 0 : i32
    %c0_i32_0 = arith.constant 0 : i32
    return %c0_i32 : i32
  }
  func.func @transform_2(%arg0: i32, %arg1: i32) -> (i32, i32, i32, i32) {
    %c0_i32 = arith.constant 0 : i32
    %c0_i32_0 = arith.constant 0 : i32
    %c0_i32_1 = arith.constant 0 : i32
    return %arg0, %c0_i32, %arg1, %c0_i32_0 : i32, i32, i32, i32
  }
  func.func @transform_3(%arg0: i32, %arg1: i32) -> (i32, i32, i32, i32) {
    %c0_i32 = arith.constant 0 : i32
    %c0_i32_0 = arith.constant 0 : i32
    %c0_i32_1 = arith.constant 0 : i32
    return %arg0, %c0_i32, %arg1, %c0_i32_0 : i32, i32, i32, i32
  }
}

</mosaic_0001>

<llo_original>
// kernel: tpu_custom_call.1
$region0: #{tpu_custom_call.1}
  #allocation0 [shape = 'u32[]', space=smem, size = 0x4, offset = 0x4, fixed_abs, tag = 'smem constant byte address 0x4 - core index']
  #allocation1 [shape = 'u32[72,128]{1,0:T(1,128)}', space=vmem, size = 0x9000, scoped, tag = 'internal scratch']
  %s0 = inlined_call_operand.hbm [shape: f32[3], index: 0, kind: input, shape index: {}]
  %s1 = inlined_call_operand.hbm [shape: f32[3], index: 1, kind: input, shape index: {}]
  %s2 = inlined_call_operand.hbm [shape: f32[2,3,1,256], index: 2, kind: input, shape index: {}]
  %s3 = inlined_call_operand.hbm [shape: f32[2,3,1,256], index: 3, kind: output, shape index: {}]
  %s4 = sld [smem:[#allocation0]]
  $region34: #{tpu_custom_call.1} parent=0
    _
  %s6 = ssub.s32 1, %s4
  %s7 = scalar_select 0, %s6, %s4
  $region1: #{tpu_custom_call.1} parent=0
    #allocation2 [shape = 'u8[512]{0}', space=smem, size = 0x200, scoped, tag = 'input window, operand 0, single buffered']
    #allocation3 [shape = 's32[1]{0}', space=sflag, size = 0x4, scoped, tag = 'scoped memory for tpu_custom_call.1']
    #allocation4 [shape = 's32[1]{0}', space=sflag, size = 0x4, scoped, tag = 'scoped memory for tpu_custom_call.1']
    #allocation5 [shape = 's32[1]{0}', space=sflag, size = 0x4, scoped, tag = 'scoped memory for tpu_custom_call.1']
    #allocation6 [shape = 'u8[512]{0}', space=smem, size = 0x200, scoped, tag = 'input window, operand 1, single buffered']
    #allocation7 [shape = 's32[1]{0}', space=sflag, size = 0x4, scoped, tag = 'scoped memory for tpu_custom_call.1']
    #allocation8 [shape = 'u8[6144]{0}', space=vmem, size = 0x1800, scoped, tag = 'input window, operand 2, single buffered']
    #allocation9 [shape = 'u8[6144]{0}', space=vmem, size = 0x1800, scoped, tag = 'output window, operand 0, single buffered']
    %8 = vsyncpa [#allocation5], 0
    %9 = vsyncpa [#allocation7], 0
    %10 = vsyncpa [#allocation3], 0
    %11 = vsyncpa [#allocation4], 0
    // Predicated region
    $region2: #{tpu_custom_call.1} parent=1 // pred_check
      _
    $region3: #{tpu_custom_call.1} parent=1 // pred_check_branch
      %13 = sbr.rel (0) target = $region5
    $region4: #{tpu_custom_call.1} parent=1 // pred_region
      %15 = vsyncadd [#allocation5], 0
      %s17 = sshll.u32 %s0, 4
      %s18 = int_to_ptr.hbm [resolvable:$true] %s17
      %20 = dma.hbm_to_smem %s18, 16, [#allocation2], [#allocation5]
    $region5: #{tpu_custom_call.1} parent=1 // pred_fallthru
      _
    // Predicated region
    $region6: #{tpu_custom_call.1} parent=1 // pred_check
      _
    $region7: #{tpu_custom_call.1} parent=1 // pred_check_branch
      %22 = sbr.rel (0) target = $region9
    $region8: #{tpu_custom_call.1} parent=1 // pred_region
      %24 = vsyncadd [#allocation7], 0
      %s26 = sshll.u32 %s1, 4
      %s27 = int_to_ptr.hbm [resolvable:$true] %s26
      %29 = dma.hbm_to_smem %s27, 16, [#allocation6], [#allocation7]
    $region9: #{tpu_custom_call.1} parent=1 // pred_fallthru
      _
    // Predicated region
    $region10: #{tpu_custom_call.1} parent=1 // pred_check
      _
    $region11: #{tpu_custom_call.1} parent=1 // pred_check_branch
      %31 = sbr.rel (0) target = $region13
    $region12: #{tpu_custom_call.1} parent=1 // pred_region
      %33 = vsyncadd [#allocation3], 0
      %s34 = sshll.u32 %s2, 4
      %s35 = int_to_ptr.hbm [resolvable:$true] %s34
      %s36 = sshll.u32 [#allocation8], 4
      %s37 = int_to_ptr.vmem [resolvable:$true] %s36
      %42 = dma.hbm_to_vmem [thread:$0]  %s35, 192, %s37, [#allocation3], 32, 32, 2
    $region13: #{tpu_custom_call.1} parent=1 // pred_fallthru
      _
    // Predicated region
    $region14: #{tpu_custom_call.1} parent=1 // pred_check
      _
    $region15: #{tpu_custom_call.1} parent=1 // pred_check_branch
      %44 = sbr.rel (0) target = $region17
    $region16: #{tpu_custom_call.1} parent=1 // pred_region
      %46 = dma.done [#allocation5], 16
    $region17: #{tpu_custom_call.1} parent=1 // pred_fallthru
      _
    // Predicated region
    $region18: #{tpu_custom_call.1} parent=1 // pred_check
      _
    $region19: #{tpu_custom_call.1} parent=1 // pred_check_branch
      %48 = sbr.rel (0) target = $region21
    $region20: #{tpu_custom_call.1} parent=1 // pred_region
      %50 = dma.done [#allocation7], 16
    $region21: #{tpu_custom_call.1} parent=1 // pred_fallthru
      _
    // Predicated region
    $region22: #{tpu_custom_call.1} parent=1 // pred_check
      _
    $region23: #{tpu_custom_call.1} parent=1 // pred_check_branch
      %52 = sbr.rel (0) target = $region25
    $region24: #{tpu_custom_call.1} parent=1 // pred_region
      %54 = dma.done [#allocation3], 192
    $region25: #{tpu_custom_call.1} parent=1 // pred_fallthru
      _
    %55 = sfence
    %v56 = vld [vmem:[#allocation8] sm:$0x3]
    %v57 = vld [vmem:[#allocation8 + $0x6] sm:$0x3]
    %s58 = sld [smem:[#allocation2]]
    %v59 = vstv %s58
    %v60 = vsub.f32 %v56, %v59
    %v61 = vsub.f32 %v57, %v59
    %s62 = sld [smem:[#allocation6]]
    %v63 = vstv %s62
    %v64 = vmul.f32 %v60, %v63
    %v65 = vmul.f32 %v61, %v63
    %v66 = vlaneseq
    %vm67 = vcmp.ge.s32.totalorder %v66, 0
    %vm68 = vcmp.lt.s32.totalorder %v66, 256
    %vm69 = vmand %vm67, %vm68
    %70 = vst.msk [vmem:[#allocation9] sm:$0x3] %vm69, %v64
    %71 = vst.msk [vmem:[#allocation9 + $0x6] sm:$0x3] %vm69, %v65
    %s72 = scalar_lea.vmem [#allocation8], 2
    %v73 = vld [vmem:[%s72] sm:$0x3]
    %v74 = vld [vmem:[%s72 + $0x6] sm:$0x3]
    %s75 = sld [smem:[#allocation2 + $0x1]]
    %v76 = vstv %s75
    %v77 = vsub.f32 %v73, %v76
    %v78 = vsub.f32 %v74, %v76
    %s79 = sld [smem:[#allocation6 + $0x1]]
    %v80 = vstv %s79
    %v81 = vmul.f32 %v77, %v80
    %v82 = vmul.f32 %v78, %v80
    %s83 = scalar_lea.vmem [#allocation9], 2
    %84 = vst.msk [vmem:[%s83] sm:$0x3] %vm69, %v81
    %85 = vst.msk [vmem:[%s83 + $0x6] sm:$0x3] %vm69, %v82
    %s86 = scalar_lea.vmem [#allocation8], 4
    %v87 = vld [vmem:[%s86] sm:$0x3]
    %v88 = vld [vmem:[%s86 + $0x6] sm:$0x3]
    %s89 = sld [smem:[#allocation2 + $0x2]]
    %v90 = vstv %s89
    %v91 = vsub.f32 %v87, %v90
    %v92 = vsub.f32 %v88, %v90
    %s93 = sld [smem:[#allocation6 + $0x2]]
    %v94 = vstv %s93
    %v95 = vmul.f32 %v91, %v94
    %v96 = vmul.f32 %v92, %v94
    %s97 = scalar_lea.vmem [#allocation9], 4
    %98 = vst.msk [vmem:[%s97] sm:$0x3] %vm69, %v95
    %99 = vst.msk [vmem:[%s97 + $0x6] sm:$0x3] %vm69, %v96
    // Predicated region
    $region26: #{tpu_custom_call.1} parent=1 // pred_check
      _
    $region27: #{tpu_custom_call.1} parent=1 // pred_check_branch
      %101 = sbr.rel (0) target = $region29
    $region28: #{tpu_custom_call.1} parent=1 // pred_region
      %103 = vsyncadd [#allocation4], 0
      %s104 = sshll.u32 [#allocation9], 4
      %s105 = int_to_ptr.vmem [resolvable:$true] %s104
      %s106 = sshll.u32 %s3, 4
      %s107 = int_to_ptr.hbm [resolvable:$true] %s106
      %112 = dma.vmem_to_hbm [thread:$0]  %s105, 192, %s107, [#allocation4], 32, 32, 2
    $region29: #{tpu_custom_call.1} parent=1 // pred_fallthru
      _
    // Predicated region
    $region30: #{tpu_custom_call.1} parent=1 // pred_check
      _
    $region31: #{tpu_custom_call.1} parent=1 // pred_check_branch
      %114 = sbr.rel (0) target = $region33
    $region32: #{tpu_custom_call.1} parent=1 // pred_region
      %116 = dma.done [#allocation4], 192
    $region33: #{tpu_custom_call.1} parent=1 // pred_fallthru
      _
    %117 = vsyncpa [#allocation3], 1
    %118 = vsyncpa [#allocation4], 1
    %119 = vsyncpa [#allocation5], 1
    %120 = vsyncpa [#allocation7], 1

</llo_original>
